<compile_context>
chip_gen: v5e
topology: v5e:2x2
jax: 0.10.0
libtpu: 0.0.40
codegen_flags: <defaults>
</compile_context>

<pallas_src>
import numpy as np
import jax
import jax.numpy as jnp
from jax import lax
from jax.experimental import pallas as pl
from jax.experimental.pallas import tpu as pltpu

CLS_TOKEN = 101
NUM_LABELS = 2
LPAD = 16          # classifier rows padded to one bf16 sublane tile


def _segment_loss_kernel(lab_ref, sent_ref, w_ref, b_ref, out_ref):
    """One grid step = BB batch items, fully lane-dense along BB*T.

    lab_ref:  (1, 1, BB*T) int32  labels (already -1 where invalid / padded)
    sent_ref: (1, H, BB*T) bf16   gathered CLS hidden states (transposed layout)
    w_ref:    (LPAD, H)    bf16   classifier weight^T, rows >= NUM_LABELS are 0
    b_ref:    (LPAD, 1)    f32    classifier bias,     rows >= NUM_LABELS are 0
    out_ref:  (1, 8, 128)  f32    sublane 0 = loss sum, sublane 1 = valid count
    """
    # (LPAD, H) @ (H, BB*T) on the MXU, bf16 inputs + f32 accumulation.
    logits = jnp.dot(w_ref[...], sent_ref[0],
                     preferred_element_type=jnp.float32) + b_ref[...]   # (LPAD, BTS)
    z0 = logits[0:1, :]                                                 # (1, BTS)
    z1 = logits[1:2, :]                                                 # (1, BTS)

    lab = lab_ref[0]                                                    # (1, BTS)
    # ignore_index = -1 (labels >= NUM_LABELS are also ignored here; torch raises).
    valid = jnp.logical_and(lab >= 0, lab < NUM_LABELS).astype(jnp.float32)

    # 2-class log-sum-exp cross entropy with a 2-way lane select (no one-hot).
    m = jnp.maximum(z0, z1)
    lse = m + jnp.log(jnp.exp(z0 - m) + jnp.exp(z1 - m))
    picked = jnp.where(lab == 0, z0, z1)

    loss_sum = jnp.sum((lse - picked) * valid)
    cnt_sum = jnp.sum(valid)

    # Single combined, lane-dense output block: sublane 0 = loss, sublane 1 = count.
    row = lax.broadcasted_iota(jnp.int32, (8, 128), 0)
    out_ref[0] = jnp.where(row == 0, loss_sum,
                           jnp.where(row == 1, cnt_sum, 0.0))


def segment_predictor_loss(document, segment_label, hidden, w, b, *,
                           max_turns, block_batch=32):
    """Mean cross-entropy over CLS-token representations (ignore_index = -1)."""
    B, S = document.shape
    H = hidden.shape[-1]
    T = max_turns

    document = document.astype(jnp.int32)
    segment_label = segment_label[:, :T].astype(jnp.int32)

    # --- cheap integer preprocessing + CLS-row gather in plain XLA ---------------
    # Reads only the <=T used rows of `hidden` per item instead of streaming all S
    # rows through the kernel; no full-array pad / dtype-cast copies of `hidden`.
    is_cls = document == CLS_TOKEN                                        # (B, S)
    turn_num = jnp.sum(is_cls.astype(jnp.int32), axis=-1, keepdims=True)  # (B, 1)

    # Stable argsort puts CLS positions first, in original order.  Slots
    # t >= turn_num point at arbitrary rows and are neutralized by label == -1.
    cls_pos = jnp.argsort((~is_cls).astype(jnp.int32), axis=-1,
                          stable=True)[:, :T]                             # (B, T)
    sent = jnp.take_along_axis(hidden, cls_pos[:, :, None], axis=1)       # (B, T, H)

    # segment_label[i][turn_num[i]:] = -1   (same masking as the torch module).
    t_iota = jnp.arange(T, dtype=jnp.int32)[None, :]
    lab = jnp.where(t_iota < turn_num, segment_label, -1)                 # (B, T)

    # --- group BB items per grid step (only the small gathered arrays) -----------
    BB = max(1, min(block_batch, B))
    BB = ((BB + 7) // 8) * 8              # keeps BB*T a multiple of 128 for T=16
    G = (B + BB - 1) // BB
    Bp = G * BB
    if Bp != B:
        pad = Bp - B
        sent = jnp.pad(sent, ((0, pad), (0, 0), (0, 0)))
        lab = jnp.pad(lab, ((0, pad), (0, 0)), constant_values=-1)
    BTS = BB * T

    # Transposed so the per-position axis (BB*T) is lane-major everywhere in the
    # kernel; bf16 halves the traffic of the dominant streamed input.
    sent_t = jnp.transpose(sent.reshape(G, BTS, H), (0, 2, 1)).astype(jnp.bfloat16)
    lab = lab.reshape(G, 1, BTS)

    w_t = jnp.zeros((LPAD, H), jnp.bfloat16).at[:NUM_LABELS, :].set(
        jnp.transpose(w).astype(jnp.bfloat16))
    b_col = jnp.zeros((LPAD, 1), jnp.float32).at[:NUM_LABELS, 0].set(
        b.astype(jnp.float32))

    grid_spec = pltpu.PrefetchScalarGridSpec(
        num_scalar_prefetch=0,
        grid=(G,),
        in_specs=[
            pl.BlockSpec((1, 1, BTS), lambda i: (i, 0, 0)),   # labels (lane-dense)
            pl.BlockSpec((1, H, BTS), lambda i: (i, 0, 0)),   # gathered CLS reps
            pl.BlockSpec((LPAD, H), lambda i: (0, 0)),        # classifier W^T (bf16)
            pl.BlockSpec((LPAD, 1), lambda i: (0, 0)),        # classifier bias (f32)
        ],
        out_specs=pl.BlockSpec((1, 8, 128), lambda i: (i, 0, 0)),
    )
    out = pl.pallas_call(
        _segment_loss_kernel,
        grid_spec=grid_spec,
        out_shape=jax.ShapeDtypeStruct((G, 8, 128), jnp.float32),
        compiler_params=pltpu.CompilerParams(dimension_semantics=("parallel",)),
    )(lab, sent_t, w_t, b_col)

    total = jnp.sum(out[:, 0, 0])
    count = jnp.sum(out[:, 1, 0])
    # torch returns NaN when every target is ignored (count == 0); we return 0.
    return total / jnp.maximum(count, 1.0)


if __name__ == "__main__":
    B, S, H, T = 13, 128, 128, 16       # B=13 also exercises the batch-padding path
    VOCAB = 1000

    key = jax.random.PRNGKey(0)
    k_emb, k_doc, k_lab, k_w, k_b = jax.random.split(key, 5)

    # TODO(synk): the pretrained BertModel encoder has no clean Pallas equivalent
    # here; stand in with a deterministic token-embedding table so `hidden`
    # plays the role of all_seq_hs = BertModel(document)[0].
    emb_table = jax.random.normal(k_emb, (VOCAB, H), jnp.float32) * 0.02

    doc_np = np.array(jax.random.randint(k_doc, (B, S), 200, VOCAB, dtype=jnp.int32))
    for i in range(B):                               # varying turn counts (1..6)
        n_turns = (i % 6) + 1
        for t in range(n_turns):
            doc_np[i, (t * 17 + i) % S] = CLS_TOKEN
    document = jnp.asarray(doc_np)

    seg_np = np.array(jax.random.randint(k_lab, (B, T), 0, NUM_LABELS, dtype=jnp.int32))
    seg_np[3, 1] = -1                                # exercise ignore_index inside turns
    seg_np[5, 0] = -1
    segment_label = jnp.asarray(seg_np)

    w = jax.random.normal(k_w, (H, NUM_LABELS), jnp.float32) * 0.05
    b = jax.random.normal(k_b, (NUM_LABELS,), jnp.float32) * 0.05

    hidden = emb_table[document]                     # [B, S, H] f32

    loss = segment_predictor_loss(document, segment_label, hidden, w, b,
                                  max_turns=T, block_batch=32)
    loss = jax.block_until_ready(loss)

    # Pure numpy reference of the post-encoder forward (gather CLS, linear, CE).
    hid_np = np.asarray(hidden)
    lab_np = np.asarray(segment_label)
    w_np = np.asarray(w)
    b_np = np.asarray(b)
    total, cnt = 0.0, 0
    for i in range(B):
        reps = hid_np[i][doc_np[i] == CLS_TOKEN]     # [turn_i, H]
        logits = reps @ w_np + b_np
        for t in range(reps.shape[0]):
            y = int(lab_np[i, t])
            if y < 0:
                continue
            z = logits[t]
            mz = z.max()
            total += (mz + np.log(np.exp(z - mz).sum())) - z[y]
            cnt += 1
    ref = total / cnt

    assert abs(float(loss) - float(ref)) < 1e-3, (float(loss), float(ref))
    print("KERNEL_OK")
</pallas_src>

<mosaic_0001>
module attributes {stable_mosaic.version = 11 : i64} {
  func.func @_segment_loss_kernel(%arg0: i32, %arg1: memref<1x1x256xi32, #tpu.memory_space<vmem>>, %arg2: memref<1x128x256xbf16, #tpu.memory_space<vmem>>, %arg3: memref<16x128xbf16, #tpu.memory_space<vmem>>, %arg4: memref<16x1xf32, #tpu.memory_space<vmem>>, %arg5: memref<1x8x128xf32, #tpu.memory_space<vmem>>) attributes {dimension_semantics = [#tpu.dimension_semantics<parallel>], iteration_bounds = array<i64: 1>, scalar_prefetch = 0 : i64, scratch_operands = 0 : i64, tpu.core_type = #tpu.core_type<tc>, window_params = [{transform_indices = @transform_0, window_bounds = array<i64: 1, 1, 256>}, {transform_indices = @transform_1, window_bounds = array<i64: 1, 128, 256>}, {pipeline_mode = #tpu.pipeline_mode<synchronous>, transform_indices = @transform_2, window_bounds = array<i64: 16, 128>}, {pipeline_mode = #tpu.pipeline_mode<synchronous>, transform_indices = @transform_3, window_bounds = array<i64: 16, 1>}, {transform_indices = @transform_4, window_bounds = array<i64: 1, 8, 128>}]} {
    %c0 = arith.constant 0 : index
    %c0_0 = arith.constant 0 : index
    %0 = vector.load %arg3[%c0, %c0_0] : memref<16x128xbf16, #tpu.memory_space<vmem>>, vector<16x128xbf16>
    %c0_1 = arith.constant 0 : index
    %c0_2 = arith.constant 0 : index
    %c0_3 = arith.constant 0 : index
    %1 = vector.load %arg2[%c0_1, %c0_2, %c0_3] : memref<1x128x256xbf16, #tpu.memory_space<vmem>>, vector<1x128x256xbf16>
    %2 = vector.shape_cast %1 : vector<1x128x256xbf16> to vector<128x256xbf16>
    %cst = arith.constant dense<0.000000e+00> : vector<16x256xf32>
    %3 = tpu.matmul %0, %2, %cst {dimension_numbers = #tpu.dot_dimension_numbers<[1], [0], [0], [1], [0, 0, 1, 1], [], []>} : vector<16x128xbf16>, vector<128x256xbf16>, vector<16x256xf32> -> vector<16x256xf32>
    %c0_4 = arith.constant 0 : index
    %c0_5 = arith.constant 0 : index
    %4 = vector.load %arg4[%c0_4, %c0_5] : memref<16x1xf32, #tpu.memory_space<vmem>>, vector<16x1xf32>
    %5 = vector.broadcast %4 : vector<16x1xf32> to vector<16x256xf32>
    %6 = arith.addf %3, %5 : vector<16x256xf32>
    %7 = vector.extract_strided_slice %6 {offsets = [0, 0], sizes = [1, 256], strides = [1, 1]} : vector<16x256xf32> to vector<1x256xf32>
    %8 = vector.extract_strided_slice %6 {offsets = [1, 0], sizes = [1, 256], strides = [1, 1]} : vector<16x256xf32> to vector<1x256xf32>
    %c0_6 = arith.constant 0 : index
    %c0_7 = arith.constant 0 : index
    %c0_8 = arith.constant 0 : index
    %9 = vector.load %arg1[%c0_6, %c0_7, %c0_8] : memref<1x1x256xi32, #tpu.memory_space<vmem>>, vector<1x1x256xi32>
    %10 = vector.shape_cast %9 : vector<1x1x256xi32> to vector<1x256xi32>
    %c0_i32 = arith.constant 0 : i32
    %11 = vector.broadcast %c0_i32 : i32 to vector<1x256xi32>
    %12 = arith.cmpi sge, %10, %11 : vector<1x256xi32>
    %c2_i32 = arith.constant 2 : i32
    %13 = vector.broadcast %c2_i32 : i32 to vector<1x256xi32>
    %14 = arith.cmpi slt, %10, %13 : vector<1x256xi32>
    %15 = arith.andi %12, %14 : vector<1x256xi1>
    %16 = arith.extui %15 : vector<1x256xi1> to vector<1x256xi32>
    %17 = arith.sitofp %16 : vector<1x256xi32> to vector<1x256xf32>
    %18 = arith.maximumf %7, %8 : vector<1x256xf32>
    %19 = arith.subf %7, %18 : vector<1x256xf32>
    %20 = math.exp %19 : vector<1x256xf32>
    %21 = arith.subf %8, %18 : vector<1x256xf32>
    %22 = math.exp %21 : vector<1x256xf32>
    %23 = arith.addf %20, %22 : vector<1x256xf32>
    %24 = math.log %23 : vector<1x256xf32>
    %25 = arith.addf %18, %24 : vector<1x256xf32>
    %c0_i32_9 = arith.constant 0 : i32
    %26 = vector.broadcast %c0_i32_9 : i32 to vector<1x256xi32>
    %27 = arith.cmpi eq, %10, %26 : vector<1x256xi32>
    %28 = arith.select %27, %7, %8 : vector<1x256xi1>, vector<1x256xf32>
    %29 = arith.subf %25, %28 : vector<1x256xf32>
    %30 = arith.mulf %29, %17 : vector<1x256xf32>
    %31 = vector.shape_cast %30 : vector<1x256xf32> to vector<1x1x256xf32>
    %cst_10 = arith.constant dense<0.000000e+00> : vector<1xf32>
    %32 = vector.multi_reduction <add>, %31, %cst_10 [1, 2] : vector<1x1x256xf32> to vector<1xf32>
    %33 = vector.shape_cast %32 : vector<1xf32> to vector<1x1x1xf32>
    %34 = vector.extract %33[0, 0, 0] : f32 from vector<1x1x1xf32>
    %35 = vector.shape_cast %17 : vector<1x256xf32> to vector<1x1x256xf32>
    %cst_11 = arith.constant dense<0.000000e+00> : vector<1xf32>
    %36 = vector.multi_reduction <add>, %35, %cst_11 [1, 2] : vector<1x1x256xf32> to vector<1xf32>
    %37 = vector.shape_cast %36 : vector<1xf32> to vector<1x1x1xf32>
    %38 = vector.extract %37[0, 0, 0] : f32 from vector<1x1x1xf32>
    %39 = tpu.iota {dimensions = array<i32: 0>} : vector<8x128xi32>
    %c0_i32_12 = arith.constant 0 : i32
    %40 = vector.broadcast %c0_i32_12 : i32 to vector<8x128xi32>
    %41 = arith.cmpi eq, %39, %40 : vector<8x128xi32>
    %c1_i32 = arith.constant 1 : i32
    %42 = vector.broadcast %c1_i32 : i32 to vector<8x128xi32>
    %43 = arith.cmpi eq, %39, %42 : vector<8x128xi32>
    %cst_13 = arith.constant 0.000000e+00 : f32
    %44 = vector.broadcast %38 : f32 to vector<8x128xf32>
    %45 = vector.broadcast %cst_13 : f32 to vector<8x128xf32>
    %46 = arith.select %43, %44, %45 : vector<8x128xi1>, vector<8x128xf32>
    %47 = vector.broadcast %34 : f32 to vector<8x128xf32>
    %48 = arith.select %41, %47, %46 : vector<8x128xi1>, vector<8x128xf32>
    %c0_14 = arith.constant 0 : index
    %c0_15 = arith.constant 0 : index
    %c0_16 = arith.constant 0 : index
    %49 = vector.load %arg5[%c0_14, %c0_15, %c0_16] : memref<1x8x128xf32, #tpu.memory_space<vmem>>, vector<1x8x128xf32>
    %50 = vector.shape_cast %49 : vector<1x8x128xf32> to vector<8x128xf32>
    %51 = vector.shape_cast %48 : vector<8x128xf32> to vector<1x8x128xf32>
    tpu.vector_store %arg5[%c0_14, %c0_15, %c0_16], %51 {strides = array<i32>} : memref<1x8x128xf32, #tpu.memory_space<vmem>>, vector<1x8x128xf32>,
    return
  }
  func.func @transform_0(%arg0: i32) -> (i32, i32, i32) {
    %c0_i32 = arith.constant 0 : i32
    %c0_i32_0 = arith.constant 0 : i32
    %c0_i32_1 = arith.constant 0 : i32
    return %arg0, %c0_i32, %c0_i32_0 : i32, i32, i32
  }
  func.func @transform_1(%arg0: i32) -> (i32, i32, i32) {
    %c0_i32 = arith.constant 0 : i32
    %c0_i32_0 = arith.constant 0 : i32
    %c0_i32_1 = arith.constant 0 : i32
    return %arg0, %c0_i32, %c0_i32_0 : i32, i32, i32
  }
  func.func @transform_2(%arg0: i32) -> (i32, i32) {
    %c0_i32 = arith.constant 0 : i32
    %c0_i32_0 = arith.constant 0 : i32
    %c0_i32_1 = arith.constant 0 : i32
    return %c0_i32, %c0_i32_0 : i32, i32
  }
  func.func @transform_3(%arg0: i32) -> (i32, i32) {
    %c0_i32 = arith.constant 0 : i32
    %c0_i32_0 = arith.constant 0 : i32
    %c0_i32_1 = arith.constant 0 : i32
    return %c0_i32, %c0_i32_0 : i32, i32
  }
  func.func @transform_4(%arg0: i32) -> (i32, i32, i32) {
    %c0_i32 = arith.constant 0 : i32
    %c0_i32_0 = arith.constant 0 : i32
    %c0_i32_1 = arith.constant 0 : i32
    return %arg0, %c0_i32, %c0_i32_0 : i32, i32, i32
  }
}

</mosaic_0001>

<llo_original>
// kernel: tpu_custom_call.1
$region0: #{tpu_custom_call.1}
  #allocation0 [shape = 'u32[]', space=smem, size = 0x4, offset = 0x4, fixed_abs, tag = 'smem constant byte address 0x4 - core index']
  #allocation1 [shape = 'u32[72,128]{1,0:T(1,128)}', space=vmem, size = 0x9000, scoped, tag = 'internal scratch']
  %s0 = inlined_call_operand.vmem [shape: s32[1,1,256], index: 0, kind: input, shape index: {}]
  %s1 = inlined_call_operand.hbm [shape: bf16[1,128,256], index: 1, kind: input, shape index: {}]
  %s2 = inlined_call_operand.vmem [shape: bf16[16,128], index: 2, kind: input, shape index: {}]
  %s3 = inlined_call_operand.vmem [shape: f32[16,1], index: 3, kind: input, shape index: {}]
  %s4 = inlined_call_operand.hbm [shape: f32[1,8,128], index: 4, kind: output, shape index: {}]
  %s5 = sld [smem:[#allocation0]]
  $region30: #{tpu_custom_call.1} parent=0
    _
  %s7 = ssub.s32 1, %s5
  %s8 = scalar_select 0, %s7, %s5
  $region1: #{tpu_custom_call.1} parent=0
    #allocation2 [shape = 'u8[65536]{0}', space=vmem, size = 0x10000, scoped, tag = 'input window, operand 1, single buffered']
    #allocation3 [shape = 's32[1]{0}', space=sflag, size = 0x4, scoped, tag = 'scoped memory for tpu_custom_call.1']
    #allocation4 [shape = 's32[1]{0}', space=sflag, size = 0x4, scoped, tag = 'scoped memory for tpu_custom_call.1']
    #allocation5 [shape = 'u8[4096]{0}', space=vmem, size = 0x1000, scoped, tag = 'output window, operand 0, single buffered']
    %9 = vsyncpa [#allocation3], 0
    %10 = vsyncpa [#allocation4], 0
    // Predicated region
    $region2: #{tpu_custom_call.1} parent=1 // pred_check
      _
    $region3: #{tpu_custom_call.1} parent=1 // pred_check_branch
      %12 = sbr.rel (0) target = $region5
    $region4: #{tpu_custom_call.1} parent=1 // pred_region
      _
    $region5: #{tpu_custom_call.1} parent=1 // pred_fallthru
      _
    // Predicated region
    $region6: #{tpu_custom_call.1} parent=1 // pred_check
      _
    $region7: #{tpu_custom_call.1} parent=1 // pred_check_branch
      %14 = sbr.rel (0) target = $region9
    $region8: #{tpu_custom_call.1} parent=1 // pred_region
      %16 = vsyncadd [#allocation3], 0
      %s17 = sshll.u32 %s1, 4
      %s18 = int_to_ptr.hbm [resolvable:$true] %s17
      %s19 = sshll.u32 [#allocation2], 4
      %s20 = int_to_ptr.vmem [resolvable:$true] %s19
      %25 = dma.hbm_to_vmem [thread:$0]  %s18, 2048, %s20, [#allocation3], 128, 128, 8
    $region9: #{tpu_custom_call.1} parent=1 // pred_fallthru
      _
    // Predicated region
    $region10: #{tpu_custom_call.1} parent=1 // pred_check
      _
    $region11: #{tpu_custom_call.1} parent=1 // pred_check_branch
      %27 = sbr.rel (0) target = $region13
    $region12: #{tpu_custom_call.1} parent=1 // pred_region
      _
    $region13: #{tpu_custom_call.1} parent=1 // pred_fallthru
      _
    // Predicated region
    $region14: #{tpu_custom_call.1} parent=1 // pred_check
      _
    $region15: #{tpu_custom_call.1} parent=1 // pred_check_branch
      %29 = sbr.rel (0) target = $region17
    $region16: #{tpu_custom_call.1} parent=1 // pred_region
      _
    $region17: #{tpu_custom_call.1} parent=1 // pred_fallthru
      _
    // Predicated region
    $region18: #{tpu_custom_call.1} parent=1 // pred_check
      _
    $region19: #{tpu_custom_call.1} parent=1 // pred_check_branch
      %31 = sbr.rel (0) target = $region21
    $region20: #{tpu_custom_call.1} parent=1 // pred_region
      %33 = dma.done [#allocation3], 2048
    $region21: #{tpu_custom_call.1} parent=1 // pred_fallthru
      _
    %v34 = vld [vmem:[%s2] sm:$0xf]
    %v35 = vld [vmem:[%s2 + $0x4] sm:$0xf]
    %v36 = vld [vmem:[#allocation2] sm:$0xff]
    %v37 = vld [vmem:[#allocation2 + $0x8] sm:$0xff]
    %v38 = vld [vmem:[#allocation2 + $0x10] sm:$0xff]
    %v39 = vld [vmem:[#allocation2 + $0x18] sm:$0xff]
    %v40 = vld [vmem:[#allocation2 + $0x20] sm:$0xff]
    %v41 = vld [vmem:[#allocation2 + $0x28] sm:$0xff]
    %v42 = vld [vmem:[#allocation2 + $0x30] sm:$0xff]
    %v43 = vld [vmem:[#allocation2 + $0x38] sm:$0xff]
    %v44 = vld [vmem:[#allocation2 + $0x40] sm:$0xff]
    %v45 = vld [vmem:[#allocation2 + $0x48] sm:$0xff]
    %v46 = vld [vmem:[#allocation2 + $0x50] sm:$0xff]
    %v47 = vld [vmem:[#allocation2 + $0x58] sm:$0xff]
    %v48 = vld [vmem:[#allocation2 + $0x60] sm:$0xff]
    %v49 = vld [vmem:[#allocation2 + $0x68] sm:$0xff]
    %v50 = vld [vmem:[#allocation2 + $0x70] sm:$0xff]
    %v51 = vld [vmem:[#allocation2 + $0x78] sm:$0xff]
    %v52 = vld [vmem:[%s3] sm:$0xff]
    %v53 = vld [vmem:[%s3 + $0x8] sm:$0xff]
    %55 = vset.pattern.permute.xlu0 0
    %56 = vperm.xlu0 %55, %v52
    %v57 = vpop.permute.xlu0 %56
    %60 = vset.pattern.permute.xlu0 0
    %61 = vperm.xlu0 %60, %v53
    %v62 = vpop.permute.xlu0 %61
    %v65 = vunpack.c.l.b16 %v34
    %v66 = vunpack.c.l.b16 %v35
    %v67 = vpack.c.b16 %v66, %v65
    %v85 = vunpack.c.l.b16 %v36
    %v86 = vunpack.c.h.b16 %v36
    %v87 = vunpack.c.l.b16 %v37
    %v88 = vunpack.c.h.b16 %v37
    %v89 = vunpack.c.l.b16 %v38
    %v90 = vunpack.c.h.b16 %v38
    %v91 = vunpack.c.l.b16 %v39
    %v92 = vunpack.c.h.b16 %v39
    %v93 = vunpack.c.l.b16 %v40
    %v94 = vunpack.c.h.b16 %v40
    %v95 = vunpack.c.l.b16 %v41
    %v96 = vunpack.c.h.b16 %v41
    %v97 = vunpack.c.l.b16 %v42
    %v98 = vunpack.c.h.b16 %v42
    %v99 = vunpack.c.l.b16 %v43
    %v100 = vunpack.c.h.b16 %v43
    %v101 = vunpack.c.l.b16 %v44
    %v102 = vunpack.c.h.b16 %v44
    %v103 = vunpack.c.l.b16 %v45
    %v104 = vunpack.c.h.b16 %v45
    %v105 = vunpack.c.l.b16 %v46
    %v106 = vunpack.c.h.b16 %v46
    %v107 = vunpack.c.l.b16 %v47
    %v108 = vunpack.c.h.b16 %v47
    %v109 = vunpack.c.l.b16 %v48
    %v110 = vunpack.c.h.b16 %v48
    %v111 = vunpack.c.l.b16 %v49
    %v112 = vunpack.c.h.b16 %v49
    %v113 = vunpack.c.l.b16 %v50
    %v114 = vunpack.c.h.b16 %v50
    %v115 = vunpack.c.l.b16 %v51
    %v116 = vunpack.c.h.b16 %v51
    %v117 = vpack.c.b16 %v87, %v85
    %v118 = vpack.c.b16 %v88, %v86
    %v119 = vpack.c.b16 %v91, %v89
    %v120 = vpack.c.b16 %v92, %v90
    %v121 = vpack.c.b16 %v95, %v93
    %v122 = vpack.c.b16 %v96, %v94
    %v123 = vpack.c.b16 %v99, %v97
    %v124 = vpack.c.b16 %v100, %v98
    %v125 = vpack.c.b16 %v103, %v101
    %v126 = vpack.c.b16 %v104, %v102
    %v127 = vpack.c.b16 %v107, %v105
    %v128 = vpack.c.b16 %v108, %v106
    %v129 = vpack.c.b16 %v111, %v109
    %v130 = vpack.c.b16 %v112, %v110
    %v131 = vpack.c.b16 %v115, %v113
    %v132 = vpack.c.b16 %v116, %v114
    %149 = vmatpush.bf16.msra.mxu0 %v131
    %150 = vmatpush.bf16.msra.mxu0 %v129
    %151 = vmatpush.bf16.msra.mxu0 %v127
    %152 = vmatpush.bf16.msra.mxu0 %v125
    %153 = vmatpush.bf16.msra.mxu0 %v123
    %154 = vmatpush.bf16.msra.mxu0 %v121
    %155 = vmatpush.bf16.msra.mxu0 %v119
    %156 = vmatpush.bf16.msra.mxu0 %v117
    %157 = vmatmul.bf16.gmra.mxu0 %v67
    %v158 = vpop.f32.mrf.mxu0
    %v159 = vadd.f32 %v57, %v158
    %v160 = vpop.f32.mrf.mxu0
    %161 = vdwg.mxu0
    %162 = vmatpush.bf16.msra.mxu0 %v132
    %163 = vmatpush.bf16.msra.mxu0 %v130
    %164 = vmatpush.bf16.msra.mxu0 %v128
    %165 = vmatpush.bf16.msra.mxu0 %v126
    %166 = vmatpush.bf16.msra.mxu0 %v124
    %167 = vmatpush.bf16.msra.mxu0 %v122
    %168 = vmatpush.bf16.msra.mxu0 %v120
    %169 = vmatpush.bf16.msra.mxu0 %v118
    %170 = vmatmul.bf16.gmra.mxu0 %v67
    %v171 = vpop.f32.mrf.mxu0
    %v172 = vadd.f32 %v57, %v171
    %v173 = vpop.f32.mrf.mxu0
    %174 = vdwg.mxu0
    %v175 = vld [vmem:[%s0] sm:$0x3]
    %vm176 = vcmp.ge.s32.totalorder %v175, 0
    %vm177 = vcmp.lt.s32.totalorder %v175, 2
    %vm178 = vmand %vm176, %vm177
    %v179 = vsel %vm178, 1, 0
    %v180 = vcvt.s32.f32 %v179
    %v183 = vrot.slane %v159, 1
    %v184 = vrot.slane %v172, 1
    %v187 = vmax.f32 %v159, %v183
    %v188 = vmax.f32 %v172, %v184
    %v189 = vsub.f32 %v159, %v187
    %v190 = vsub.f32 %v172, %v188
    %v191 = vmul.f32 %v189, 1.442695
    %v192 = vpow.pop %v191
    %v193 = vmul.f32 %v190, 1.442695
    %v194 = vpow.pop %v193
    %v197 = vrot.slane %v187, 7
    %v198 = vrot.slane %v188, 7
    %v201 = vsub.f32 %v159, %v197
    %v202 = vsub.f32 %v172, %v198
    %v203 = vmul.f32 %v201, 1.442695
    %v204 = vpow.pop %v203
    %v205 = vmul.f32 %v202, 1.442695
    %v206 = vpow.pop %v205
    %v209 = vrot.slane %v204, 1
    %v210 = vrot.slane %v206, 1
    %v213 = vadd.f32 %v192, %v209
    %v214 = vadd.f32 %v194, %v210
    %v215 = vlog2.pop %v213
    %v216 = vmul.f32 %v215, 0.6931472
    %v217 = vlog2.pop %v214
    %v218 = vmul.f32 %v217, 0.6931472
    %v219 = vadd.f32 %v187, %v216
    %v220 = vadd.f32 %v188, %v218
    %vm221 = vcmp.eq.s32.totalorder %v175, 0
    %v222 = vrot.slane %v172, 7
    %vm223 = vcmask 1040384
    %v224 = vsel %vm223, %v159, %v222
    %226 = vst [vmem:[#allocation1] sm:$0xff] %v159
    %227 = vst [vmem:[#allocation1 + $0x9] sm:$0xff] %v172
    %s228 = scalar_lea.vmem [#allocation1], 1
    %v229 = vld [vmem:[%s228] ss:$9 sm:$0xff]
    %v231 = vsel %vm221, %v224, %v229
    %v233 = vperm.slane %v231, 0
    %v234 = vperm.slane %v231, 1
    %v237 = vsub.f32 %v219, %v233
    %v238 = vsub.f32 %v220, %v234
    %v240 = vperm.slane %v180, 0
    %v241 = vperm.slane %v180, 1
    %v244 = vmul.f32 %v237, %v240
    %v245 = vmul.f32 %v238, %v241
    %v246 = vsel %vm223, %v244, 0.0
    %v247 = vsel %vm223, %v245, 0.0
    %v248 = vadd.f32 %v246, %v247
    %249 = vadd.xlane.f32.xlu0 %v248
    %v250 = vpop.xlane.xlu0 %249
    %v251 = vrot.slane %v250, 4
    %v252 = vadd.f32 %v250, %v251
    %v253 = vrot.slane %v252, 2
    %v254 = vadd.f32 %v252, %v253
    %v255 = vrot.slane %v254, 1
    %v256 = vadd.f32 %v254, %v255
    %s257 = vtos %v256
    %v258 = vsel %vm223, %v240, 0.0
    %v259 = vsel %vm223, %v241, 0.0
    %v260 = vadd.f32 %v258, %v259
    %261 = vadd.xlane.f32.xlu0 %v260
    %v262 = vpop.xlane.xlu0 %261
    %v263 = vrot.slane %v262, 4
    %v264 = vadd.f32 %v262, %v263
    %v265 = vrot.slane %v264, 2
    %v266 = vadd.f32 %v264, %v265
    %v267 = vrot.slane %v266, 1
    %v268 = vadd.f32 %v266, %v267
    %s269 = vtos %v268
    %v270 = vlaneseq
    %v271 = vshrl.u32 %v270, 7
    %vm272 = vcmp.eq.s32.totalorder %v271, 0
    %vm273 = vcmp.eq.s32.totalorder %v271, 1
    %v274 = vstv %s269
    %v275 = vsel %vm273, %v274, 0.0
    %v276 = vstv %s257
    %v277 = vsel %vm272, %v276, %v275
    %278 = vst [vmem:[#allocation5] sm:$0xff] %v277
    // Predicated region
    $region22: #{tpu_custom_call.1} parent=1 // pred_check
      _
    $region23: #{tpu_custom_call.1} parent=1 // pred_check_branch
      %280 = sbr.rel (0) target = $region25
    $region24: #{tpu_custom_call.1} parent=1 // pred_region
      %282 = vsyncadd [#allocation4], 0
      %s284 = sshll.u32 [#allocation5], 4
      %s285 = int_to_ptr.vmem [resolvable:$true] %s284
      %s286 = sshll.u32 %s4, 4
      %s287 = int_to_ptr.hbm [resolvable:$true] %s286
      %289 = dma.vmem_to_hbm [thread:$0]  %s285, 128, %s287, [#allocation4]
    $region25: #{tpu_custom_call.1} parent=1 // pred_fallthru
      _
    // Predicated region
    $region26: #{tpu_custom_call.1} parent=1 // pred_check
      _
    $region27: #{tpu_custom_call.1} parent=1 // pred_check_branch
      %291 = sbr.rel (0) target = $region29
    $region28: #{tpu_custom_call.1} parent=1 // pred_region
      %293 = dma.done [#allocation4], 128
    $region29: #{tpu_custom_call.1} parent=1 // pred_fallthru
      _
    %294 = vsyncpa [#allocation3], 1
    %295 = vsyncpa [#allocation4], 1

</llo_original>
